<compile_context>
chip_gen: v6e
topology: v6e:2x2x1
jax: 0.10.0
libtpu: 0.0.40
codegen_flags: <defaults>
</compile_context>

<pallas_src>
import jax
import jax.numpy as jnp
from jax.experimental import pallas as pl
from jax.experimental.pallas import tpu as pltpu

NEG_SLOPE = 0.01  # nn.LeakyReLU default negative_slope


def _leaky_relu(x):
    # 2 VPU ops (mul + max) instead of 3 (mul + cmp + select).
    return jnp.maximum(x, NEG_SLOPE * x)


def mlp_kernel(x_ref, w1_ref, b1_ref, w2_ref, b2_ref, w4_ref, b4_ref, o_ref):
    # Shapes (R = tile_rows = tile_n / g):
    #   x_ref  (R, g*3) f32          w1_ref (g*3,  g*64) f32   (block-diag)
    #   w2_ref (g*64, g*64) bf16/f32 w4_ref (g*64, g)    bf16/f32 (block-diag)
    #   b1/b2  (1, g*64) f32         b4     (1, g) f32
    #   o_ref  (R, g) f32
    x = x_ref[...]
    w1 = w1_ref[...]
    compute_dtype = w2_ref.dtype  # bf16 fast path or f32 validation path

    # ---- f1: Linear(3 -> 64) per group, on the VPU (skip a near-empty MXU pass)
    h = b1_ref[...] + x[:, 0:1] * w1[0:1, :]
    for k in range(1, w1.shape[0]):          # g*3 broadcast FMAs, unrolled
        h = h + x[:, k:k + 1] * w1[k:k + 1, :]
    h = _leaky_relu(h)                       # (R, g*64) f32
    # dropout p=0.1 -> identity (eval mode)

    # ---- f2 applied 6x with the SAME (block-diagonal) weights ----
    w2 = w2_ref[...]                         # (g*64, g*64) compute_dtype
    b2 = b2_ref[...]                         # (1, g*64) — splat in-vreg, no full-tile temp
    for _ in range(6):                       # small fixed trip count, unrolled
        h = jnp.dot(h.astype(compute_dtype), w2,
                    preferred_element_type=jnp.float32) + b2
        h = _leaky_relu(h)

    # ---- f4: Linear(64 -> 1) folded into the packed scheme as (g*64, g) ----
    out = jnp.dot(h.astype(compute_dtype), w4_ref[...],
                  preferred_element_type=jnp.float32) + b4_ref[...]
    o_ref[...] = jnp.tanh(out)               # (R, g)


def _pick_group_size():
    """g row-groups packed per MXU pass: 4 for 256-wide MXUs, 2 for 128-wide."""
    try:
        kind = jax.devices()[0].device_kind.lower()
    except Exception:
        return 4
    if "v6" in kind or "v7" in kind:
        return 4
    if "v5" in kind or "v4" in kind:
        return 2
    return 4


def _block_diag(w, g):
    # block_diag(w, w, ..., w)  (g copies)
    return jnp.kron(jnp.eye(g, dtype=w.dtype), w)


def network_forward(x, params, *, tile_n=4096, g=None, use_bf16=True):
    """x: (N, 3) float32 -> (N, 1) float32."""
    w1, b1, w2, b2, w4, b4 = params
    n = x.shape[0]
    if g is None:
        g = _pick_group_size()

    # ---- pack params: block-diag weights carry g independent row-groups ----
    w1_blk = _block_diag(w1, g)              # (g*3,  g*64) f32 (VPU layer)
    w2_blk = _block_diag(w2, g)              # (g*64, g*64)
    w4_blk = _block_diag(w4, g)              # (g*64, g)
    b1_t = jnp.tile(b1, (1, g))              # (1, g*64)
    b2_t = jnp.tile(b2, (1, g))              # (1, g*64)
    b4_t = jnp.tile(b4, (1, g))              # (1, g)
    if use_bf16:
        # MXU operands in bf16 on every generation (incl. v5e); accumulate f32.
        w2_blk = w2_blk.astype(jnp.bfloat16)
        w4_blk = w4_blk.astype(jnp.bfloat16)

    # ---- tile sizing: multiple of 8*g rows; >=2 grid steps when possible ----
    unit = 8 * g
    n_unit = pl.cdiv(n, unit) * unit
    tile_n = max(unit, min(tile_n, n_unit))
    tile_n = pl.cdiv(tile_n, unit) * unit                   # legal block shape
    if pl.cdiv(n_unit, tile_n) < 2 and n_unit >= 2 * unit:
        tile_n = pl.cdiv(pl.cdiv(n_unit, 2), unit) * unit   # feed both v7x TCs
    n_pad = pl.cdiv(n, tile_n) * tile_n
    tile_rows = tile_n // g

    if n_pad != n:
        x = jnp.pad(x, ((0, n_pad - n), (0, 0)))
    # Row-group packing: original row i*g+j, feature k -> packed[i, j*3 + k]
    x_packed = x.reshape(n_pad // g, g * 3)

    grid = (n_pad // tile_n,)

    def resident(shape):
        # Grid-invariant index_map -> DMA'd once, stays resident in VMEM.
        return pl.BlockSpec(shape, lambda i: (0, 0))

    out_packed = pl.pallas_call(
        mlp_kernel,
        out_shape=jax.ShapeDtypeStruct((n_pad // g, g), jnp.float32),
        grid=grid,
        in_specs=[
            pl.BlockSpec((tile_rows, g * 3), lambda i: (i, 0)),  # x tiles, pipelined
            resident((g * 3, g * 64)),   # w1 block-diag (f32, VPU layer)
            resident((1, g * 64)),       # b1 tiled
            resident((g * 64, g * 64)),  # w2 block-diag
            resident((1, g * 64)),       # b2 tiled
            resident((g * 64, g)),       # w4 block-diag
            resident((1, g)),            # b4 tiled
        ],
        out_specs=pl.BlockSpec((tile_rows, g), lambda i: (i, 0)),
        compiler_params=pltpu.CompilerParams(
            dimension_semantics=("parallel",),        # megacore split on v7x
            vmem_limit_bytes=32 * 1024 * 1024,
        ),
    )(x_packed, w1_blk, b1_t, w2_blk, b2_t, w4_blk, b4_t)

    # Un-pack: row-major flatten of (n_pad//g, g) restores the original row order.
    return out_packed.reshape(n_pad, 1)[:n]


def init_params(key):
    """Deterministic init mimicking PyTorch nn.Linear default U(-1/sqrt(fan_in), .)."""
    k1, k2, k3, k4, k5, k6 = jax.random.split(key, 6)

    def uniform(k, shape, fan_in):
        bound = 1.0 / jnp.sqrt(jnp.float32(fan_in))
        return jax.random.uniform(k, shape, jnp.float32, -bound, bound)

    w1 = uniform(k1, (3, 64), 3)      # stored transposed: (in, out)
    b1 = uniform(k2, (1, 64), 3)
    w2 = uniform(k3, (64, 64), 64)
    b2 = uniform(k4, (1, 64), 64)
    w4 = uniform(k5, (64, 1), 64)
    b4 = uniform(k6, (1, 1), 64)
    return (w1, b1, w2, b2, w4, b4)


def reference_forward(x, params):
    """Plain-JAX f32 reference for sanity checking."""
    w1, b1, w2, b2, w4, b4 = params
    h = _leaky_relu(x @ w1 + b1)
    for _ in range(6):
        h = _leaky_relu(h @ w2 + b2)
    return jnp.tanh(h @ w4 + b4)


if __name__ == "__main__":
    key = jax.random.PRNGKey(0)
    k_params, k_x1, k_x2, k_x3 = jax.random.split(key, 4)
    params = init_params(k_params)

    # Small batch consistent with the module's (N, 3) input.
    x_small = jax.random.normal(k_x1, (8, 3), jnp.float32)
    ref_small = reference_forward(x_small, params)

    # f32 path: tight check against reference.
    out_f32 = jax.block_until_ready(network_forward(x_small, params, use_bf16=False))
    assert out_f32.shape == (8, 1), out_f32.shape
    assert jnp.allclose(out_f32, ref_small, atol=1e-5, rtol=1e-5), "f32 mismatch"

    # bf16 MXU path: looser tolerance (bf16 operands, f32 accumulate).
    out_bf16 = jax.block_until_ready(network_forward(x_small, params, use_bf16=True))
    assert out_bf16.shape == (8, 1), out_bf16.shape
    assert float(jnp.max(jnp.abs(out_bf16 - ref_small))) < 1e-1, "bf16 mismatch"

    # Non-multiple batch + odd tile_n: exercises group packing, padding,
    # tile rounding to 8*g, and a multi-step "parallel" grid.
    x_big = jax.random.normal(k_x2, (1003, 3), jnp.float32)
    ref_big = reference_forward(x_big, params)
    out_big = jax.block_until_ready(
        network_forward(x_big, params, tile_n=100, use_bf16=False))
    assert out_big.shape == (1003, 1), out_big.shape
    assert jnp.allclose(out_big, ref_big, atol=1e-5, rtol=1e-5), "tiled mismatch"

    # Default tile_n with a mid-size batch: the >=2-grid-step rule must split it.
    x_mid = jax.random.normal(k_x3, (1000, 3), jnp.float32)
    ref_mid = reference_forward(x_mid, params)
    out_mid = jax.block_until_ready(network_forward(x_mid, params, use_bf16=False))
    assert out_mid.shape == (1000, 1), out_mid.shape
    assert jnp.allclose(out_mid, ref_mid, atol=1e-5, rtol=1e-5), "split-grid mismatch"

    # Explicit g=2 path (v5e-style packing) for coverage.
    out_g2 = jax.block_until_ready(
        network_forward(x_small, params, g=2, use_bf16=False))
    assert jnp.allclose(out_g2, ref_small, atol=1e-5, rtol=1e-5), "g=2 mismatch"

    print("KERNEL_OK")
</pallas_src>

<mosaic_0001>
module attributes {stable_mosaic.version = 11 : i64} {
  func.func @mlp_kernel(%arg0: i32, %arg1: memref<8x12xf32, #tpu.memory_space<vmem>>, %arg2: memref<12x256xf32, #tpu.memory_space<vmem>>, %arg3: memref<1x256xf32, #tpu.memory_space<vmem>>, %arg4: memref<256x256xf32, #tpu.memory_space<vmem>>, %arg5: memref<1x256xf32, #tpu.memory_space<vmem>>, %arg6: memref<256x4xf32, #tpu.memory_space<vmem>>, %arg7: memref<1x4xf32, #tpu.memory_space<vmem>>, %arg8: memref<8x4xf32, #tpu.memory_space<vmem>>) attributes {dimension_semantics = [#tpu.dimension_semantics<parallel>], iteration_bounds = array<i64: 1>, scalar_prefetch = 0 : i64, scratch_operands = 0 : i64, tpu.core_type = #tpu.core_type<tc>, window_params = [{transform_indices = @transform_0, window_bounds = array<i64: 8, 12>}, {pipeline_mode = #tpu.pipeline_mode<synchronous>, transform_indices = @transform_1, window_bounds = array<i64: 12, 256>}, {pipeline_mode = #tpu.pipeline_mode<synchronous>, transform_indices = @transform_2, window_bounds = array<i64: 1, 256>}, {pipeline_mode = #tpu.pipeline_mode<synchronous>, transform_indices = @transform_3, window_bounds = array<i64: 256, 256>}, {pipeline_mode = #tpu.pipeline_mode<synchronous>, transform_indices = @transform_4, window_bounds = array<i64: 1, 256>}, {pipeline_mode = #tpu.pipeline_mode<synchronous>, transform_indices = @transform_5, window_bounds = array<i64: 256, 4>}, {pipeline_mode = #tpu.pipeline_mode<synchronous>, transform_indices = @transform_6, window_bounds = array<i64: 1, 4>}, {transform_indices = @transform_7, window_bounds = array<i64: 8, 4>}]} {
    %c0 = arith.constant 0 : index
    %c0_0 = arith.constant 0 : index
    %0 = vector.load %arg1[%c0, %c0_0] : memref<8x12xf32, #tpu.memory_space<vmem>>, vector<8x12xf32>
    %c0_1 = arith.constant 0 : index
    %c0_2 = arith.constant 0 : index
    %1 = vector.load %arg2[%c0_1, %c0_2] : memref<12x256xf32, #tpu.memory_space<vmem>>, vector<12x256xf32>
    %c0_3 = arith.constant 0 : index
    %c0_4 = arith.constant 0 : index
    %2 = vector.load %arg3[%c0_3, %c0_4] : memref<1x256xf32, #tpu.memory_space<vmem>>, vector<1x256xf32>
    %3 = vector.extract_strided_slice %0 {offsets = [0, 0], sizes = [8, 1], strides = [1, 1]} : vector<8x12xf32> to vector<8x1xf32>
    %4 = vector.extract_strided_slice %1 {offsets = [0, 0], sizes = [1, 256], strides = [1, 1]} : vector<12x256xf32> to vector<1x256xf32>
    %5 = vector.broadcast %3 : vector<8x1xf32> to vector<8x256xf32>
    %6 = vector.broadcast %4 : vector<1x256xf32> to vector<8x256xf32>
    %7 = arith.mulf %5, %6 : vector<8x256xf32>
    %8 = vector.broadcast %2 : vector<1x256xf32> to vector<8x256xf32>
    %9 = arith.addf %8, %7 : vector<8x256xf32>
    %10 = vector.extract_strided_slice %0 {offsets = [0, 1], sizes = [8, 1], strides = [1, 1]} : vector<8x12xf32> to vector<8x1xf32>
    %11 = vector.extract_strided_slice %1 {offsets = [1, 0], sizes = [1, 256], strides = [1, 1]} : vector<12x256xf32> to vector<1x256xf32>
    %12 = vector.broadcast %10 : vector<8x1xf32> to vector<8x256xf32>
    %13 = vector.broadcast %11 : vector<1x256xf32> to vector<8x256xf32>
    %14 = arith.mulf %12, %13 : vector<8x256xf32>
    %15 = arith.addf %9, %14 : vector<8x256xf32>
    %16 = vector.extract_strided_slice %0 {offsets = [0, 2], sizes = [8, 1], strides = [1, 1]} : vector<8x12xf32> to vector<8x1xf32>
    %17 = vector.extract_strided_slice %1 {offsets = [2, 0], sizes = [1, 256], strides = [1, 1]} : vector<12x256xf32> to vector<1x256xf32>
    %18 = vector.broadcast %16 : vector<8x1xf32> to vector<8x256xf32>
    %19 = vector.broadcast %17 : vector<1x256xf32> to vector<8x256xf32>
    %20 = arith.mulf %18, %19 : vector<8x256xf32>
    %21 = arith.addf %15, %20 : vector<8x256xf32>
    %22 = vector.extract_strided_slice %0 {offsets = [0, 3], sizes = [8, 1], strides = [1, 1]} : vector<8x12xf32> to vector<8x1xf32>
    %23 = vector.extract_strided_slice %1 {offsets = [3, 0], sizes = [1, 256], strides = [1, 1]} : vector<12x256xf32> to vector<1x256xf32>
    %24 = vector.broadcast %22 : vector<8x1xf32> to vector<8x256xf32>
    %25 = vector.broadcast %23 : vector<1x256xf32> to vector<8x256xf32>
    %26 = arith.mulf %24, %25 : vector<8x256xf32>
    %27 = arith.addf %21, %26 : vector<8x256xf32>
    %28 = vector.extract_strided_slice %0 {offsets = [0, 4], sizes = [8, 1], strides = [1, 1]} : vector<8x12xf32> to vector<8x1xf32>
    %29 = vector.extract_strided_slice %1 {offsets = [4, 0], sizes = [1, 256], strides = [1, 1]} : vector<12x256xf32> to vector<1x256xf32>
    %30 = vector.broadcast %28 : vector<8x1xf32> to vector<8x256xf32>
    %31 = vector.broadcast %29 : vector<1x256xf32> to vector<8x256xf32>
    %32 = arith.mulf %30, %31 : vector<8x256xf32>
    %33 = arith.addf %27, %32 : vector<8x256xf32>
    %34 = vector.extract_strided_slice %0 {offsets = [0, 5], sizes = [8, 1], strides = [1, 1]} : vector<8x12xf32> to vector<8x1xf32>
    %35 = vector.extract_strided_slice %1 {offsets = [5, 0], sizes = [1, 256], strides = [1, 1]} : vector<12x256xf32> to vector<1x256xf32>
    %36 = vector.broadcast %34 : vector<8x1xf32> to vector<8x256xf32>
    %37 = vector.broadcast %35 : vector<1x256xf32> to vector<8x256xf32>
    %38 = arith.mulf %36, %37 : vector<8x256xf32>
    %39 = arith.addf %33, %38 : vector<8x256xf32>
    %40 = vector.extract_strided_slice %0 {offsets = [0, 6], sizes = [8, 1], strides = [1, 1]} : vector<8x12xf32> to vector<8x1xf32>
    %41 = vector.extract_strided_slice %1 {offsets = [6, 0], sizes = [1, 256], strides = [1, 1]} : vector<12x256xf32> to vector<1x256xf32>
    %42 = vector.broadcast %40 : vector<8x1xf32> to vector<8x256xf32>
    %43 = vector.broadcast %41 : vector<1x256xf32> to vector<8x256xf32>
    %44 = arith.mulf %42, %43 : vector<8x256xf32>
    %45 = arith.addf %39, %44 : vector<8x256xf32>
    %46 = vector.extract_strided_slice %0 {offsets = [0, 7], sizes = [8, 1], strides = [1, 1]} : vector<8x12xf32> to vector<8x1xf32>
    %47 = vector.extract_strided_slice %1 {offsets = [7, 0], sizes = [1, 256], strides = [1, 1]} : vector<12x256xf32> to vector<1x256xf32>
    %48 = vector.broadcast %46 : vector<8x1xf32> to vector<8x256xf32>
    %49 = vector.broadcast %47 : vector<1x256xf32> to vector<8x256xf32>
    %50 = arith.mulf %48, %49 : vector<8x256xf32>
    %51 = arith.addf %45, %50 : vector<8x256xf32>
    %52 = vector.extract_strided_slice %0 {offsets = [0, 8], sizes = [8, 1], strides = [1, 1]} : vector<8x12xf32> to vector<8x1xf32>
    %53 = vector.extract_strided_slice %1 {offsets = [8, 0], sizes = [1, 256], strides = [1, 1]} : vector<12x256xf32> to vector<1x256xf32>
    %54 = vector.broadcast %52 : vector<8x1xf32> to vector<8x256xf32>
    %55 = vector.broadcast %53 : vector<1x256xf32> to vector<8x256xf32>
    %56 = arith.mulf %54, %55 : vector<8x256xf32>
    %57 = arith.addf %51, %56 : vector<8x256xf32>
    %58 = vector.extract_strided_slice %0 {offsets = [0, 9], sizes = [8, 1], strides = [1, 1]} : vector<8x12xf32> to vector<8x1xf32>
    %59 = vector.extract_strided_slice %1 {offsets = [9, 0], sizes = [1, 256], strides = [1, 1]} : vector<12x256xf32> to vector<1x256xf32>
    %60 = vector.broadcast %58 : vector<8x1xf32> to vector<8x256xf32>
    %61 = vector.broadcast %59 : vector<1x256xf32> to vector<8x256xf32>
    %62 = arith.mulf %60, %61 : vector<8x256xf32>
    %63 = arith.addf %57, %62 : vector<8x256xf32>
    %64 = vector.extract_strided_slice %0 {offsets = [0, 10], sizes = [8, 1], strides = [1, 1]} : vector<8x12xf32> to vector<8x1xf32>
    %65 = vector.extract_strided_slice %1 {offsets = [10, 0], sizes = [1, 256], strides = [1, 1]} : vector<12x256xf32> to vector<1x256xf32>
    %66 = vector.broadcast %64 : vector<8x1xf32> to vector<8x256xf32>
    %67 = vector.broadcast %65 : vector<1x256xf32> to vector<8x256xf32>
    %68 = arith.mulf %66, %67 : vector<8x256xf32>
    %69 = arith.addf %63, %68 : vector<8x256xf32>
    %70 = vector.extract_strided_slice %0 {offsets = [0, 11], sizes = [8, 1], strides = [1, 1]} : vector<8x12xf32> to vector<8x1xf32>
    %71 = vector.extract_strided_slice %1 {offsets = [11, 0], sizes = [1, 256], strides = [1, 1]} : vector<12x256xf32> to vector<1x256xf32>
    %72 = vector.broadcast %70 : vector<8x1xf32> to vector<8x256xf32>
    %73 = vector.broadcast %71 : vector<1x256xf32> to vector<8x256xf32>
    %74 = arith.mulf %72, %73 : vector<8x256xf32>
    %75 = arith.addf %69, %74 : vector<8x256xf32>
    %cst = arith.constant 0.00999999977 : f32
    %76 = vector.broadcast %cst : f32 to vector<8x256xf32>
    %77 = arith.mulf %76, %75 : vector<8x256xf32>
    %78 = arith.maximumf %75, %77 : vector<8x256xf32>
    %c0_5 = arith.constant 0 : index
    %c0_6 = arith.constant 0 : index
    %79 = vector.load %arg4[%c0_5, %c0_6] : memref<256x256xf32, #tpu.memory_space<vmem>>, vector<256x256xf32>
    %c0_7 = arith.constant 0 : index
    %c0_8 = arith.constant 0 : index
    %80 = vector.load %arg5[%c0_7, %c0_8] : memref<1x256xf32, #tpu.memory_space<vmem>>, vector<1x256xf32>
    %cst_9 = arith.constant dense<0.000000e+00> : vector<8x256xf32>
    %81 = tpu.matmul %78, %79, %cst_9 {dimension_numbers = #tpu.dot_dimension_numbers<[1], [0], [0], [1], [0, 0, 1, 1], [], []>} : vector<8x256xf32>, vector<256x256xf32>, vector<8x256xf32> -> vector<8x256xf32>
    %82 = vector.broadcast %80 : vector<1x256xf32> to vector<8x256xf32>
    %83 = arith.addf %81, %82 : vector<8x256xf32>
    %cst_10 = arith.constant 0.00999999977 : f32
    %84 = vector.broadcast %cst_10 : f32 to vector<8x256xf32>
    %85 = arith.mulf %84, %83 : vector<8x256xf32>
    %86 = arith.maximumf %83, %85 : vector<8x256xf32>
    %cst_11 = arith.constant dense<0.000000e+00> : vector<8x256xf32>
    %87 = tpu.matmul %86, %79, %cst_11 {dimension_numbers = #tpu.dot_dimension_numbers<[1], [0], [0], [1], [0, 0, 1, 1], [], []>} : vector<8x256xf32>, vector<256x256xf32>, vector<8x256xf32> -> vector<8x256xf32>
    %88 = vector.broadcast %80 : vector<1x256xf32> to vector<8x256xf32>
    %89 = arith.addf %87, %88 : vector<8x256xf32>
    %cst_12 = arith.constant 0.00999999977 : f32
    %90 = vector.broadcast %cst_12 : f32 to vector<8x256xf32>
    %91 = arith.mulf %90, %89 : vector<8x256xf32>
    %92 = arith.maximumf %89, %91 : vector<8x256xf32>
    %cst_13 = arith.constant dense<0.000000e+00> : vector<8x256xf32>
    %93 = tpu.matmul %92, %79, %cst_13 {dimension_numbers = #tpu.dot_dimension_numbers<[1], [0], [0], [1], [0, 0, 1, 1], [], []>} : vector<8x256xf32>, vector<256x256xf32>, vector<8x256xf32> -> vector<8x256xf32>
    %94 = vector.broadcast %80 : vector<1x256xf32> to vector<8x256xf32>
    %95 = arith.addf %93, %94 : vector<8x256xf32>
    %cst_14 = arith.constant 0.00999999977 : f32
    %96 = vector.broadcast %cst_14 : f32 to vector<8x256xf32>
    %97 = arith.mulf %96, %95 : vector<8x256xf32>
    %98 = arith.maximumf %95, %97 : vector<8x256xf32>
    %cst_15 = arith.constant dense<0.000000e+00> : vector<8x256xf32>
    %99 = tpu.matmul %98, %79, %cst_15 {dimension_numbers = #tpu.dot_dimension_numbers<[1], [0], [0], [1], [0, 0, 1, 1], [], []>} : vector<8x256xf32>, vector<256x256xf32>, vector<8x256xf32> -> vector<8x256xf32>
    %100 = vector.broadcast %80 : vector<1x256xf32> to vector<8x256xf32>
    %101 = arith.addf %99, %100 : vector<8x256xf32>
    %cst_16 = arith.constant 0.00999999977 : f32
    %102 = vector.broadcast %cst_16 : f32 to vector<8x256xf32>
    %103 = arith.mulf %102, %101 : vector<8x256xf32>
    %104 = arith.maximumf %101, %103 : vector<8x256xf32>
    %cst_17 = arith.constant dense<0.000000e+00> : vector<8x256xf32>
    %105 = tpu.matmul %104, %79, %cst_17 {dimension_numbers = #tpu.dot_dimension_numbers<[1], [0], [0], [1], [0, 0, 1, 1], [], []>} : vector<8x256xf32>, vector<256x256xf32>, vector<8x256xf32> -> vector<8x256xf32>
    %106 = vector.broadcast %80 : vector<1x256xf32> to vector<8x256xf32>
    %107 = arith.addf %105, %106 : vector<8x256xf32>
    %cst_18 = arith.constant 0.00999999977 : f32
    %108 = vector.broadcast %cst_18 : f32 to vector<8x256xf32>
    %109 = arith.mulf %108, %107 : vector<8x256xf32>
    %110 = arith.maximumf %107, %109 : vector<8x256xf32>
    %cst_19 = arith.constant dense<0.000000e+00> : vector<8x256xf32>
    %111 = tpu.matmul %110, %79, %cst_19 {dimension_numbers = #tpu.dot_dimension_numbers<[1], [0], [0], [1], [0, 0, 1, 1], [], []>} : vector<8x256xf32>, vector<256x256xf32>, vector<8x256xf32> -> vector<8x256xf32>
    %112 = vector.broadcast %80 : vector<1x256xf32> to vector<8x256xf32>
    %113 = arith.addf %111, %112 : vector<8x256xf32>
    %cst_20 = arith.constant 0.00999999977 : f32
    %114 = vector.broadcast %cst_20 : f32 to vector<8x256xf32>
    %115 = arith.mulf %114, %113 : vector<8x256xf32>
    %116 = arith.maximumf %113, %115 : vector<8x256xf32>
    %c0_21 = arith.constant 0 : index
    %c0_22 = arith.constant 0 : index
    %117 = vector.load %arg6[%c0_21, %c0_22] : memref<256x4xf32, #tpu.memory_space<vmem>>, vector<256x4xf32>
    %cst_23 = arith.constant dense<0.000000e+00> : vector<8x4xf32>
    %118 = tpu.matmul %116, %117, %cst_23 {dimension_numbers = #tpu.dot_dimension_numbers<[1], [0], [0], [1], [0, 0, 1, 1], [], []>} : vector<8x256xf32>, vector<256x4xf32>, vector<8x4xf32> -> vector<8x4xf32>
    %c0_24 = arith.constant 0 : index
    %c0_25 = arith.constant 0 : index
    %119 = vector.load %arg7[%c0_24, %c0_25] : memref<1x4xf32, #tpu.memory_space<vmem>>, vector<1x4xf32>
    %120 = vector.broadcast %119 : vector<1x4xf32> to vector<8x4xf32>
    %121 = arith.addf %118, %120 : vector<8x4xf32>
    %122 = math.tanh %121 : vector<8x4xf32>
    %c0_26 = arith.constant 0 : index
    %c0_27 = arith.constant 0 : index
    %123 = vector.load %arg8[%c0_26, %c0_27] : memref<8x4xf32, #tpu.memory_space<vmem>>, vector<8x4xf32>
    tpu.vector_store %arg8[%c0_26, %c0_27], %122 {strides = array<i32>} : memref<8x4xf32, #tpu.memory_space<vmem>>, vector<8x4xf32>,
    return
  }
  func.func @transform_0(%arg0: i32) -> (i32, i32) {
    %c0_i32 = arith.constant 0 : i32
    %c0_i32_0 = arith.constant 0 : i32
    return %arg0, %c0_i32 : i32, i32
  }
  func.func @transform_1(%arg0: i32) -> (i32, i32) {
    %c0_i32 = arith.constant 0 : i32
    %c0_i32_0 = arith.constant 0 : i32
    %c0_i32_1 = arith.constant 0 : i32
    return %c0_i32, %c0_i32_0 : i32, i32
  }
  func.func @transform_2(%arg0: i32) -> (i32, i32) {
    %c0_i32 = arith.constant 0 : i32
    %c0_i32_0 = arith.constant 0 : i32
    %c0_i32_1 = arith.constant 0 : i32
    return %c0_i32, %c0_i32_0 : i32, i32
  }
  func.func @transform_3(%arg0: i32) -> (i32, i32) {
    %c0_i32 = arith.constant 0 : i32
    %c0_i32_0 = arith.constant 0 : i32
    %c0_i32_1 = arith.constant 0 : i32
    return %c0_i32, %c0_i32_0 : i32, i32
  }
  func.func @transform_4(%arg0: i32) -> (i32, i32) {
    %c0_i32 = arith.constant 0 : i32
    %c0_i32_0 = arith.constant 0 : i32
    %c0_i32_1 = arith.constant 0 : i32
    return %c0_i32, %c0_i32_0 : i32, i32
  }
  func.func @transform_5(%arg0: i32) -> (i32, i32) {
    %c0_i32 = arith.constant 0 : i32
    %c0_i32_0 = arith.constant 0 : i32
    %c0_i32_1 = arith.constant 0 : i32
    return %c0_i32, %c0_i32_0 : i32, i32
  }
  func.func @transform_6(%arg0: i32) -> (i32, i32) {
    %c0_i32 = arith.constant 0 : i32
    %c0_i32_0 = arith.constant 0 : i32
    %c0_i32_1 = arith.constant 0 : i32
    return %c0_i32, %c0_i32_0 : i32, i32
  }
  func.func @transform_7(%arg0: i32) -> (i32, i32) {
    %c0_i32 = arith.constant 0 : i32
    %c0_i32_0 = arith.constant 0 : i32
    return %arg0, %c0_i32 : i32, i32
  }
}

</mosaic_0001>

<llo_original>
// kernel: tpu_custom_call.1
$region0: #{tpu_custom_call.1}
  #allocation0 [shape = 'u32[]', space=smem, size = 0x4, offset = 0x4, fixed_abs, tag = 'smem constant byte address 0x4 - core index']
  #allocation1 [shape = 'u32[144,128]{1,0:T(1,128)}', space=vmem, size = 0x12000, scoped, tag = 'internal scratch']
  %s0 = inlined_call_operand.vmem [shape: f32[8,12], index: 0, kind: input, shape index: {}]
  %s1 = inlined_call_operand.vmem [shape: f32[12,256], index: 1, kind: input, shape index: {}]
  %s2 = inlined_call_operand.vmem [shape: f32[1,256], index: 2, kind: input, shape index: {}]
  %s3 = inlined_call_operand.hbm [shape: f32[256,256], index: 3, kind: input, shape index: {}]
  %s4 = inlined_call_operand.vmem [shape: f32[1,256], index: 4, kind: input, shape index: {}]
  %s5 = inlined_call_operand.vmem [shape: f32[256,4], index: 5, kind: input, shape index: {}]
  %s6 = inlined_call_operand.vmem [shape: f32[1,4], index: 6, kind: input, shape index: {}]
  %s7 = inlined_call_operand.vmem [shape: f32[8,4], index: 7, kind: output, shape index: {}]
  %s8 = sld [smem:[#allocation0]]
  $region42: #{tpu_custom_call.1} parent=0
    _
  %s10 = ssub.s32 1, %s8
  %s11 = scalar_select 0, %s10, %s8
  $region1: #{tpu_custom_call.1} parent=0
    #allocation2 [shape = 'u8[262144]{0}', space=vmem, size = 0x40000, scoped, tag = 'input window, operand 3, single buffered']
    #allocation3 [shape = 's32[1]{0}', space=sflag, size = 0x4, scoped, tag = 'scoped memory for tpu_custom_call.1']
    %12 = vsyncpa [#allocation3], 0
    // Predicated region
    $region2: #{tpu_custom_call.1} parent=1 // pred_check
      _
    $region3: #{tpu_custom_call.1} parent=1 // pred_check_branch
      %14 = sbr.rel (0) target = $region5
    $region4: #{tpu_custom_call.1} parent=1 // pred_region
      _
    $region5: #{tpu_custom_call.1} parent=1 // pred_fallthru
      _
    // Predicated region
    $region6: #{tpu_custom_call.1} parent=1 // pred_check
      _
    $region7: #{tpu_custom_call.1} parent=1 // pred_check_branch
      %16 = sbr.rel (0) target = $region9
    $region8: #{tpu_custom_call.1} parent=1 // pred_region
      _
    $region9: #{tpu_custom_call.1} parent=1 // pred_fallthru
      _
    // Predicated region
    $region10: #{tpu_custom_call.1} parent=1 // pred_check
      _
    $region11: #{tpu_custom_call.1} parent=1 // pred_check_branch
      %18 = sbr.rel (0) target = $region13
    $region12: #{tpu_custom_call.1} parent=1 // pred_region
      _
    $region13: #{tpu_custom_call.1} parent=1 // pred_fallthru
      _
    // Predicated region
    $region14: #{tpu_custom_call.1} parent=1 // pred_check
      _
    $region15: #{tpu_custom_call.1} parent=1 // pred_check_branch
      %20 = sbr.rel (0) target = $region17
    $region16: #{tpu_custom_call.1} parent=1 // pred_region
      %s22 = ssub.s32 8192, 8192
      %23 = vsyncadd [#allocation3], %s22
      %s24 = sshll.u32 [#allocation2], 4
      %s25 = int_to_ptr.vmem [resolvable:$true] %s24
      %30 = dma.hbm_to_vmem [thread:$0]  %s3, 8192, %s25, [#allocation3], 256, 256, 16
    $region17: #{tpu_custom_call.1} parent=1 // pred_fallthru
      _
    // Predicated region
    $region18: #{tpu_custom_call.1} parent=1 // pred_check
      _
    $region19: #{tpu_custom_call.1} parent=1 // pred_check_branch
      %32 = sbr.rel (0) target = $region21
    $region20: #{tpu_custom_call.1} parent=1 // pred_region
      _
    $region21: #{tpu_custom_call.1} parent=1 // pred_fallthru
      _
    // Predicated region
    $region22: #{tpu_custom_call.1} parent=1 // pred_check
      _
    $region23: #{tpu_custom_call.1} parent=1 // pred_check_branch
      %34 = sbr.rel (0) target = $region25
    $region24: #{tpu_custom_call.1} parent=1 // pred_region
      _
    $region25: #{tpu_custom_call.1} parent=1 // pred_fallthru
      _
    // Predicated region
    $region26: #{tpu_custom_call.1} parent=1 // pred_check
      _
    $region27: #{tpu_custom_call.1} parent=1 // pred_check_branch
      %36 = sbr.rel (0) target = $region29
    $region28: #{tpu_custom_call.1} parent=1 // pred_region
      _
    $region29: #{tpu_custom_call.1} parent=1 // pred_fallthru
      _
    // Predicated region
    $region30: #{tpu_custom_call.1} parent=1 // pred_check
      _
    $region31: #{tpu_custom_call.1} parent=1 // pred_check_branch
      %38 = sbr.rel (0) target = $region33
    $region32: #{tpu_custom_call.1} parent=1 // pred_region
      %39 = dma.done [#allocation3], 8192
    $region33: #{tpu_custom_call.1} parent=1 // pred_fallthru
      _
    %v40 = vld [vmem:[%s0] sm:$0xff]
    %v41 = vld [vmem:[%s1] sm:$0xff]
    %v42 = vld [vmem:[%s1 + $0x8] sm:$0xff]
    %v43 = vld [vmem:[%s1 + $0x10] sm:$0xf]
    %v44 = vld [vmem:[%s1 + $0x18] sm:$0xf]
    %v45 = vld [vmem:[%s2] sm:$0x3]
    %47 = vset.pattern.permute.xlu0 0
    %48 = vperm.xlu0 %47, %v40
    %v49 = vpop.permute.xlu0 %48
    %v51 = vlaneseq
    %v52 = vshrl.u32 %v51, 7
    %v53 = vsub.s32 0, %v52
    %v54 = vrot.slane %v41, %v53
    %v55 = vlaneseq
    %v56 = vshrl.u32 %v55, 7
    %v57 = vsub.s32 0, %v56
    %v58 = vrot.slane %v42, %v57
    %v59 = vmul.f32 %v49, %v54
    %v60 = vmul.f32 %v49, %v58
    %v62 = vlaneseq
    %v63 = vshrl.u32 %v62, 7
    %v64 = vsub.s32 0, %v63
    %v65 = vrot.slane %v45, %v64
    %v66 = vlaneseq
    %v67 = vshrl.u32 %v66, 7
    %v68 = vsub.s32 1, %v67
    %v69 = vrot.slane %v45, %v68
    %v72 = vadd.f32 %v65, %v59
    %v73 = vadd.f32 %v69, %v60
    %74 = vset.pattern.permute.xlu0 1
    %75 = vperm.xlu0 %74, %v40
    %v76 = vpop.permute.xlu0 %75
    %v78 = vlaneseq
    %v79 = vshrl.u32 %v78, 7
    %v80 = vsub.s32 1, %v79
    %v81 = vrot.slane %v41, %v80
    %v82 = vlaneseq
    %v83 = vshrl.u32 %v82, 7
    %v84 = vsub.s32 1, %v83
    %v85 = vrot.slane %v42, %v84
    %v86 = vmul.f32 %v76, %v81
    %v87 = vmul.f32 %v76, %v85
    %v88 = vadd.f32 %v72, %v86
    %v89 = vadd.f32 %v73, %v87
    %90 = vset.pattern.permute.xlu0 2
    %91 = vperm.xlu0 %90, %v40
    %v92 = vpop.permute.xlu0 %91
    %v94 = vlaneseq
    %v95 = vshrl.u32 %v94, 7
    %v96 = vsub.s32 2, %v95
    %v97 = vrot.slane %v41, %v96
    %v98 = vlaneseq
    %v99 = vshrl.u32 %v98, 7
    %v100 = vsub.s32 2, %v99
    %v101 = vrot.slane %v42, %v100
    %v102 = vmul.f32 %v92, %v97
    %v103 = vmul.f32 %v92, %v101
    %v104 = vadd.f32 %v88, %v102
    %v105 = vadd.f32 %v89, %v103
    %106 = vset.pattern.permute.xlu0 3
    %107 = vperm.xlu0 %106, %v40
    %v108 = vpop.permute.xlu0 %107
    %v110 = vlaneseq
    %v111 = vshrl.u32 %v110, 7
    %v112 = vsub.s32 3, %v111
    %v113 = vrot.slane %v41, %v112
    %v114 = vlaneseq
    %v115 = vshrl.u32 %v114, 7
    %v116 = vsub.s32 3, %v115
    %v117 = vrot.slane %v42, %v116
    %v118 = vmul.f32 %v108, %v113
    %v119 = vmul.f32 %v108, %v117
    %v120 = vadd.f32 %v104, %v118
    %v121 = vadd.f32 %v105, %v119
    %122 = vset.pattern.permute.xlu0 4
    %123 = vperm.xlu0 %122, %v40
    %v124 = vpop.permute.xlu0 %123
    %v126 = vlaneseq
    %v127 = vshrl.u32 %v126, 7
    %v128 = vsub.s32 4, %v127
    %v129 = vrot.slane %v41, %v128
    %v130 = vlaneseq
    %v131 = vshrl.u32 %v130, 7
    %v132 = vsub.s32 4, %v131
    %v133 = vrot.slane %v42, %v132
    %v134 = vmul.f32 %v124, %v129
    %v135 = vmul.f32 %v124, %v133
    %v136 = vadd.f32 %v120, %v134
    %v137 = vadd.f32 %v121, %v135
    %138 = vset.pattern.permute.xlu0 5
    %139 = vperm.xlu0 %138, %v40
    %v140 = vpop.permute.xlu0 %139
    %v142 = vlaneseq
    %v143 = vshrl.u32 %v142, 7
    %v144 = vsub.s32 5, %v143
    %v145 = vrot.slane %v41, %v144
    %v146 = vlaneseq
    %v147 = vshrl.u32 %v146, 7
    %v148 = vsub.s32 5, %v147
    %v149 = vrot.slane %v42, %v148
    %v150 = vmul.f32 %v140, %v145
    %v151 = vmul.f32 %v140, %v149
    %v152 = vadd.f32 %v136, %v150
    %v153 = vadd.f32 %v137, %v151
    %154 = vset.pattern.permute.xlu0 6
    %155 = vperm.xlu0 %154, %v40
    %v156 = vpop.permute.xlu0 %155
    %v158 = vlaneseq
    %v159 = vshrl.u32 %v158, 7
    %v160 = vsub.s32 6, %v159
    %v161 = vrot.slane %v41, %v160
    %v162 = vlaneseq
    %v163 = vshrl.u32 %v162, 7
    %v164 = vsub.s32 6, %v163
    %v165 = vrot.slane %v42, %v164
    %v166 = vmul.f32 %v156, %v161
    %v167 = vmul.f32 %v156, %v165
    %v168 = vadd.f32 %v152, %v166
    %v169 = vadd.f32 %v153, %v167
    %170 = vset.pattern.permute.xlu0 7
    %171 = vperm.xlu0 %170, %v40
    %v172 = vpop.permute.xlu0 %171
    %v174 = vlaneseq
    %v175 = vshrl.u32 %v174, 7
    %v176 = vsub.s32 7, %v175
    %v177 = vrot.slane %v41, %v176
    %v178 = vlaneseq
    %v179 = vshrl.u32 %v178, 7
    %v180 = vsub.s32 7, %v179
    %v181 = vrot.slane %v42, %v180
    %v182 = vmul.f32 %v172, %v177
    %v183 = vmul.f32 %v172, %v181
    %v184 = vadd.f32 %v168, %v182
    %v185 = vadd.f32 %v169, %v183
    %186 = vset.pattern.permute.xlu0 8
    %187 = vperm.xlu0 %186, %v40
    %v188 = vpop.permute.xlu0 %187
    %v190 = vlaneseq
    %v191 = vshrl.u32 %v190, 7
    %v192 = vsub.s32 0, %v191
    %v193 = vrot.slane %v43, %v192
    %v194 = vlaneseq
    %v195 = vshrl.u32 %v194, 7
    %v196 = vsub.s32 0, %v195
    %v197 = vrot.slane %v44, %v196
    %v198 = vmul.f32 %v188, %v193
    %v199 = vmul.f32 %v188, %v197
    %v200 = vadd.f32 %v184, %v198
    %v201 = vadd.f32 %v185, %v199
    %202 = vset.pattern.permute.xlu0 9
    %203 = vperm.xlu0 %202, %v40
    %v204 = vpop.permute.xlu0 %203
    %v206 = vlaneseq
    %v207 = vshrl.u32 %v206, 7
    %v208 = vsub.s32 1, %v207
    %v209 = vrot.slane %v43, %v208
    %v210 = vlaneseq
    %v211 = vshrl.u32 %v210, 7
    %v212 = vsub.s32 1, %v211
    %v213 = vrot.slane %v44, %v212
    %v214 = vmul.f32 %v204, %v209
    %v215 = vmul.f32 %v204, %v213
    %v216 = vadd.f32 %v200, %v214
    %v217 = vadd.f32 %v201, %v215
    %218 = vset.pattern.permute.xlu0 10
    %219 = vperm.xlu0 %218, %v40
    %v220 = vpop.permute.xlu0 %219
    %v222 = vlaneseq
    %v223 = vshrl.u32 %v222, 7
    %v224 = vsub.s32 2, %v223
    %v225 = vrot.slane %v43, %v224
    %v226 = vlaneseq
    %v227 = vshrl.u32 %v226, 7
    %v228 = vsub.s32 2, %v227
    %v229 = vrot.slane %v44, %v228
    %v230 = vmul.f32 %v220, %v225
    %v231 = vmul.f32 %v220, %v229
    %v232 = vadd.f32 %v216, %v230
    %v233 = vadd.f32 %v217, %v231
    %234 = vset.pattern.permute.xlu0 11
    %235 = vperm.xlu0 %234, %v40
    %v236 = vpop.permute.xlu0 %235
    %v238 = vlaneseq
    %v239 = vshrl.u32 %v238, 7
    %v240 = vsub.s32 3, %v239
    %v241 = vrot.slane %v43, %v240
    %v242 = vlaneseq
    %v243 = vshrl.u32 %v242, 7
    %v244 = vsub.s32 3, %v243
    %v245 = vrot.slane %v44, %v244
    %v246 = vmul.f32 %v236, %v241
    %v247 = vmul.f32 %v236, %v245
    %v248 = vadd.f32 %v232, %v246
    %v249 = vadd.f32 %v233, %v247
    %v250 = vmul.f32 %v248, 0.01
    %v251 = vmul.f32 %v249, 0.01
    %v252 = vmax.f32 %v248, %v250
    %v253 = vmax.f32 %v249, %v251
    %v254 = vld [vmem:[#allocation2] sm:$0xff]
    %v255 = vld [vmem:[#allocation2 + $0x8] sm:$0xff]
    %v256 = vld [vmem:[#allocation2 + $0x10] sm:$0xff]
    %v257 = vld [vmem:[#allocation2 + $0x18] sm:$0xff]
    %v258 = vld [vmem:[#allocation2 + $0x20] sm:$0xff]
    %v259 = vld [vmem:[#allocation2 + $0x28] sm:$0xff]
    %v260 = vld [vmem:[#allocation2 + $0x30] sm:$0xff]
    %v261 = vld [vmem:[#allocation2 + $0x38] sm:$0xff]
    %v262 = vld [vmem:[#allocation2 + $0x40] sm:$0xff]
    %v263 = vld [vmem:[#allocation2 + $0x48] sm:$0xff]
    %v264 = vld [vmem:[#allocation2 + $0x50] sm:$0xff]
    %v265 = vld [vmem:[#allocation2 + $0x58] sm:$0xff]
    %v266 = vld [vmem:[#allocation2 + $0x60] sm:$0xff]
    %v267 = vld [vmem:[#allocation2 + $0x68] sm:$0xff]
    %v268 = vld [vmem:[#allocation2 + $0x70] sm:$0xff]
    %v269 = vld [vmem:[#allocation2 + $0x78] sm:$0xff]
    %v270 = vld [vmem:[#allocation2 + $0x80] sm:$0xff]
    %v271 = vld [vmem:[#allocation2 + $0x88] sm:$0xff]
    %v272 = vld [vmem:[#allocation2 + $0x90] sm:$0xff]
    %v273 = vld [vmem:[#allocation2 + $0x98] sm:$0xff]
    %v274 = vld [vmem:[#allocation2 + $0xa0] sm:$0xff]
    %v275 = vld [vmem:[#allocation2 + $0xa8] sm:$0xff]
    %v276 = vld [vmem:[#allocation2 + $0xb0] sm:$0xff]
    %v277 = vld [vmem:[#allocation2 + $0xb8] sm:$0xff]
    %v278 = vld [vmem:[#allocation2 + $0xc0] sm:$0xff]
    %v279 = vld [vmem:[#allocation2 + $0xc8] sm:$0xff]
    %v280 = vld [vmem:[#allocation2 + $0xd0] sm:$0xff]
    %v281 = vld [vmem:[#allocation2 + $0xd8] sm:$0xff]
    %v282 = vld [vmem:[#allocation2 + $0xe0] sm:$0xff]
    %v283 = vld [vmem:[#allocation2 + $0xe8] sm:$0xff]
    %v284 = vld [vmem:[#allocation2 + $0xf0] sm:$0xff]
    %v285 = vld [vmem:[#allocation2 + $0xf8] sm:$0xff]
    %v286 = vld [vmem:[#allocation2 + $0x100] sm:$0xff]
    %v287 = vld [vmem:[#allocation2 + $0x108] sm:$0xff]
    %v288 = vld [vmem:[#allocation2 + $0x110] sm:$0xff]
    %v289 = vld [vmem:[#allocation2 + $0x118] sm:$0xff]
    %v290 = vld [vmem:[#allocation2 + $0x120] sm:$0xff]
    %v291 = vld [vmem:[#allocation2 + $0x128] sm:$0xff]
    %v292 = vld [vmem:[#allocation2 + $0x130] sm:$0xff]
    %v293 = vld [vmem:[#allocation2 + $0x138] sm:$0xff]
    %v294 = vld [vmem:[#allocation2 + $0x140] sm:$0xff]
    %v295 = vld [vmem:[#allocation2 + $0x148] sm:$0xff]
    %v296 = vld [vmem:[#allocation2 + $0x150] sm:$0xff]
    %v297 = vld [vmem:[#allocation2 + $0x158] sm:$0xff]
    %v298 = vld [vmem:[#allocation2 + $0x160] sm:$0xff]
    %v299 = vld [vmem:[#allocation2 + $0x168] sm:$0xff]
    %v300 = vld [vmem:[#allocation2 + $0x170] sm:$0xff]
    %v301 = vld [vmem:[#allocation2 + $0x178] sm:$0xff]
    %v302 = vld [vmem:[#allocation2 + $0x180] sm:$0xff]
    %v303 = vld [vmem:[#allocation2 + $0x188] sm:$0xff]
    %v304 = vld [vmem:[#allocation2 + $0x190] sm:$0xff]
    %v305 = vld [vmem:[#allocation2 + $0x198] sm:$0xff]
    %v306 = vld [vmem:[#allocation2 + $0x1a0] sm:$0xff]
    %v307 = vld [vmem:[#allocation2 + $0x1a8] sm:$0xff]
    %v308 = vld [vmem:[#allocation2 + $0x1b0] sm:$0xff]
    %v309 = vld [vmem:[#allocation2 + $0x1b8] sm:$0xff]
    %v310 = vld [vmem:[#allocation2 + $0x1c0] sm:$0xff]
    %v311 = vld [vmem:[#allocation2 + $0x1c8] sm:$0xff]
    %v312 = vld [vmem:[#allocation2 + $0x1d0] sm:$0xff]
    %v313 = vld [vmem:[#allocation2 + $0x1d8] sm:$0xff]
    %v314 = vld [vmem:[#allocation2 + $0x1e0] sm:$0xff]
    %v315 = vld [vmem:[#allocation2 + $0x1e8] sm:$0xff]
    %v316 = vld [vmem:[#allocation2 + $0x1f0] sm:$0xff]
    %v317 = vld [vmem:[#allocation2 + $0x1f8] sm:$0xff]
    %v318 = vld [vmem:[%s4] sm:$0x3]
    %v320 = vlaneseq
    %v321 = vshrl.u32 %v320, 7
    %v322 = vsub.s32 0, %v321
    %v323 = vrot.slane %v318, %v322
    %v324 = vlaneseq
    %v325 = vshrl.u32 %v324, 7
    %v326 = vsub.s32 1, %v325
    %v327 = vrot.slane %v318, %v326
    %330 = vmatprep.subr.mxu0 %v285
    %331 = vmatpush1.msra.mxu0 %v284
    %332 = vmatprep.subr.mxu0 %v283
    %333 = vmatpush1.msra.mxu0 %v282
    %334 = vmatprep.subr.mxu0 %v281
    %335 = vmatpush1.msra.mxu0 %v280
    %336 = vmatprep.subr.mxu0 %v279
    %337 = vmatpush1.msra.mxu0 %v278
    %338 = vmatprep.subr.mxu0 %v277
    %339 = vmatpush1.msra.mxu0 %v276
    %340 = vmatprep.subr.mxu0 %v275
    %341 = vmatpush1.msra.mxu0 %v274
    %342 = vmatprep.subr.mxu0 %v273
    %343 = vmatpush1.msra.mxu0 %v272
    %344 = vmatprep.subr.mxu0 %v271
    %345 = vmatpush1.msra.mxu0 %v270
    %346 = vmatprep.subr.mxu0 %v269
    %347 = vmatpush1.msra.mxu0 %v268
    %348 = vmatprep.subr.mxu0 %v267
    %349 = vmatpush1.msra.mxu0 %v266
    %350 = vmatprep.subr.mxu0 %v265
    %351 = vmatpush1.msra.mxu0 %v264
    %352 = vmatprep.subr.mxu0 %v263
    %353 = vmatpush1.msra.mxu0 %v262
    %354 = vmatprep.subr.mxu0 %v261
    %355 = vmatpush1.msra.mxu0 %v260
    %356 = vmatprep.subr.mxu0 %v259
    %357 = vmatpush1.msra.mxu0 %v258
    %358 = vmatprep.subr.mxu0 %v257
    %359 = vmatpush1.msra.mxu0 %v256
    %360 = vmatprep.subr.mxu0 %v255
    %361 = vmatpush1.msra.mxu0 %v254
    %362 = vmatprep.subr.mxu0 %v317
    %363 = vmatpush2.msra.mxu0 %v316
    %364 = vmatprep.subr.mxu0 %v315
    %365 = vmatpush2.msra.mxu0 %v314
    %366 = vmatprep.subr.mxu0 %v313
    %367 = vmatpush2.msra.mxu0 %v312
    %368 = vmatprep.subr.mxu0 %v311
    %369 = vmatpush2.msra.mxu0 %v310
    %370 = vmatprep.subr.mxu0 %v309
    %371 = vmatpush2.msra.mxu0 %v308
    %372 = vmatprep.subr.mxu0 %v307
    %373 = vmatpush2.msra.mxu0 %v306
    %374 = vmatprep.subr.mxu0 %v305
    %375 = vmatpush2.msra.mxu0 %v304
    %376 = vmatprep.subr.mxu0 %v303
    %377 = vmatpush2.msra.mxu0 %v302
    %378 = vmatprep.subr.mxu0 %v301
    %379 = vmatpush2.msra.mxu0 %v300
    %380 = vmatprep.subr.mxu0 %v299
    %381 = vmatpush2.msra.mxu0 %v298
    %382 = vmatprep.subr.mxu0 %v297
    %383 = vmatpush2.msra.mxu0 %v296
    %384 = vmatprep.subr.mxu0 %v295
    %385 = vmatpush2.msra.mxu0 %v294
    %386 = vmatprep.subr.mxu0 %v293
    %387 = vmatpush2.msra.mxu0 %v292
    %388 = vmatprep.subr.mxu0 %v291
    %389 = vmatpush2.msra.mxu0 %v290
    %390 = vmatprep.subr.mxu0 %v289
    %391 = vmatpush2.msra.mxu0 %v288
    %392 = vmatprep.subr.mxu0 %v287
    %393 = vmatpush2.msra.mxu0 %v286
    %394 = vmatprep.mubr.f32.mxu0 %v253
    %395 = vmatmul.mubr.f32.gmra.mxu0 %v252
    %v396 = vpop.f32.mrf.mxu0
    %v397 = vadd.f32 %v323, %v396
    %v398 = vpop.f32.mrf.mxu0
    %v399 = vadd.f32 %v327, %v398
    %400 = vdwg.mxu0
    %v401 = vmul.f32 %v397, 0.01
    %v402 = vmul.f32 %v399, 0.01
    %v403 = vmax.f32 %v397, %v401
    %v404 = vmax.f32 %v399, %v402
    %405 = vmatprep.subr.mxu0 %v285
    %406 = vmatpush1.msra.mxu0 %v284
    %407 = vmatprep.subr.mxu0 %v283
    %408 = vmatpush1.msra.mxu0 %v282
    %409 = vmatprep.subr.mxu0 %v281
    %410 = vmatpush1.msra.mxu0 %v280
    %411 = vmatprep.subr.mxu0 %v279
    %412 = vmatpush1.msra.mxu0 %v278
    %413 = vmatprep.subr.mxu0 %v277
    %414 = vmatpush1.msra.mxu0 %v276
    %415 = vmatprep.subr.mxu0 %v275
    %416 = vmatpush1.msra.mxu0 %v274
    %417 = vmatprep.subr.mxu0 %v273
    %418 = vmatpush1.msra.mxu0 %v272
    %419 = vmatprep.subr.mxu0 %v271
    %420 = vmatpush1.msra.mxu0 %v270
    %421 = vmatprep.subr.mxu0 %v269
    %422 = vmatpush1.msra.mxu0 %v268
    %423 = vmatprep.subr.mxu0 %v267
    %424 = vmatpush1.msra.mxu0 %v266
    %425 = vmatprep.subr.mxu0 %v265
    %426 = vmatpush1.msra.mxu0 %v264
    %427 = vmatprep.subr.mxu0 %v263
    %428 = vmatpush1.msra.mxu0 %v262
    %429 = vmatprep.subr.mxu0 %v261
    %430 = vmatpush1.msra.mxu0 %v260
    %431 = vmatprep.subr.mxu0 %v259
    %432 = vmatpush1.msra.mxu0 %v258
    %433 = vmatprep.subr.mxu0 %v257
    %434 = vmatpush1.msra.mxu0 %v256
    %435 = vmatprep.subr.mxu0 %v255
    %436 = vmatpush1.msra.mxu0 %v254
    %437 = vmatprep.subr.mxu0 %v317
    %438 = vmatpush2.msra.mxu0 %v316
    %439 = vmatprep.subr.mxu0 %v315
    %440 = vmatpush2.msra.mxu0 %v314
    %441 = vmatprep.subr.mxu0 %v313
    %442 = vmatpush2.msra.mxu0 %v312
    %443 = vmatprep.subr.mxu0 %v311
    %444 = vmatpush2.msra.mxu0 %v310
    %445 = vmatprep.subr.mxu0 %v309
    %446 = vmatpush2.msra.mxu0 %v308
    %447 = vmatprep.subr.mxu0 %v307
    %448 = vmatpush2.msra.mxu0 %v306
    %449 = vmatprep.subr.mxu0 %v305
    %450 = vmatpush2.msra.mxu0 %v304
    %451 = vmatprep.subr.mxu0 %v303
    %452 = vmatpush2.msra.mxu0 %v302
    %453 = vmatprep.subr.mxu0 %v301
    %454 = vmatpush2.msra.mxu0 %v300
    %455 = vmatprep.subr.mxu0 %v299
    %456 = vmatpush2.msra.mxu0 %v298
    %457 = vmatprep.subr.mxu0 %v297
    %458 = vmatpush2.msra.mxu0 %v296
    %459 = vmatprep.subr.mxu0 %v295
    %460 = vmatpush2.msra.mxu0 %v294
    %461 = vmatprep.subr.mxu0 %v293
    %462 = vmatpush2.msra.mxu0 %v292
    %463 = vmatprep.subr.mxu0 %v291
    %464 = vmatpush2.msra.mxu0 %v290
    %465 = vmatprep.subr.mxu0 %v289
    %466 = vmatpush2.msra.mxu0 %v288
    %467 = vmatprep.subr.mxu0 %v287
    %468 = vmatpush2.msra.mxu0 %v286
    %469 = vmatprep.mubr.f32.mxu0 %v404
    %470 = vmatmul.mubr.f32.gmra.mxu0 %v403
    %v471 = vpop.f32.mrf.mxu0
    %v472 = vadd.f32 %v323, %v471
    %v473 = vpop.f32.mrf.mxu0
    %v474 = vadd.f32 %v327, %v473
    %475 = vdwg.mxu0
    %v476 = vmul.f32 %v472, 0.01
    %v477 = vmul.f32 %v474, 0.01
    %v478 = vmax.f32 %v472, %v476
    %v479 = vmax.f32 %v474, %v477
    %480 = vmatprep.subr.mxu0 %v285
    %481 = vmatpush1.msra.mxu0 %v284
    %482 = vmatprep.subr.mxu0 %v283
    %483 = vmatpush1.msra.mxu0 %v282
    %484 = vmatprep.subr.mxu0 %v281
    %485 = vmatpush1.msra.mxu0 %v280
    %486 = vmatprep.subr.mxu0 %v279
    %487 = vmatpush1.msra.mxu0 %v278
    %488 = vmatprep.subr.mxu0 %v277
    %489 = vmatpush1.msra.mxu0 %v276
    %490 = vmatprep.subr.mxu0 %v275
    %491 = vmatpush1.msra.mxu0 %v274
    %492 = vmatprep.subr.mxu0 %v273
    %493 = vmatpush1.msra.mxu0 %v272
    %494 = vmatprep.subr.mxu0 %v271
    %495 = vmatpush1.msra.mxu0 %v270
    %496 = vmatprep.subr.mxu0 %v269
    %497 = vmatpush1.msra.mxu0 %v268
    %498 = vmatprep.subr.mxu0 %v267
    %499 = vmatpush1.msra.mxu0 %v266
    %500 = vmatprep.subr.mxu0 %v265
    %501 = vmatpush1.msra.mxu0 %v264
    %502 = vmatprep.subr.mxu0 %v263
    %503 = vmatpush1.msra.mxu0 %v262
    %504 = vmatprep.subr.mxu0 %v261
    %505 = vmatpush1.msra.mxu0 %v260
    %506 = vmatprep.subr.mxu0 %v259
    %507 = vmatpush1.msra.mxu0 %v258
    %508 = vmatprep.subr.mxu0 %v257
    %509 = vmatpush1.msra.mxu0 %v256
    %510 = vmatprep.subr.mxu0 %v255
    %511 = vmatpush1.msra.mxu0 %v254
    %512 = vmatprep.subr.mxu0 %v317
    %513 = vmatpush2.msra.mxu0 %v316
    %514 = vmatprep.subr.mxu0 %v315
    %515 = vmatpush2.msra.mxu0 %v314
    %516 = vmatprep.subr.mxu0 %v313
    %517 = vmatpush2.msra.mxu0 %v312
    %518 = vmatprep.subr.mxu0 %v311
    %519 = vmatpush2.msra.mxu0 %v310
    %520 = vmatprep.subr.mxu0 %v309
    %521 = vmatpush2.msra.mxu0 %v308
    %522 = vmatprep.subr.mxu0 %v307
    %523 = vmatpush2.msra.mxu0 %v306
    %524 = vmatprep.subr.mxu0 %v305
    %525 = vmatpush2.msra.mxu0 %v304
    %526 = vmatprep.subr.mxu0 %v303
    %527 = vmatpush2.msra.mxu0 %v302
    %528 = vmatprep.subr.mxu0 %v301
    %529 = vmatpush2.msra.mxu0 %v300
    %530 = vmatprep.subr.mxu0 %v299
    %531 = vmatpush2.msra.mxu0 %v298
    %532 = vmatprep.subr.mxu0 %v297
    %533 = vmatpush2.msra.mxu0 %v296
    %534 = vmatprep.subr.mxu0 %v295
    %535 = vmatpush2.msra.mxu0 %v294
    %536 = vmatprep.subr.mxu0 %v293
    %537 = vmatpush2.msra.mxu0 %v292
    %538 = vmatprep.subr.mxu0 %v291
    %539 = vmatpush2.msra.mxu0 %v290
    %540 = vmatprep.subr.mxu0 %v289
    %541 = vmatpush2.msra.mxu0 %v288
    %542 = vmatprep.subr.mxu0 %v287
    %543 = vmatpush2.msra.mxu0 %v286
    %544 = vmatprep.mubr.f32.mxu0 %v479
    %545 = vmatmul.mubr.f32.gmra.mxu0 %v478
    %v546 = vpop.f32.mrf.mxu0
    %v547 = vadd.f32 %v323, %v546
    %v548 = vpop.f32.mrf.mxu0
    %v549 = vadd.f32 %v327, %v548
    %550 = vdwg.mxu0
    %v551 = vmul.f32 %v547, 0.01
    %v552 = vmul.f32 %v549, 0.01
    %v553 = vmax.f32 %v547, %v551
    %v554 = vmax.f32 %v549, %v552
    %555 = vmatprep.subr.mxu0 %v285
    %556 = vmatpush1.msra.mxu0 %v284
    %557 = vmatprep.subr.mxu0 %v283
    %558 = vmatpush1.msra.mxu0 %v282
    %559 = vmatprep.subr.mxu0 %v281
    %560 = vmatpush1.msra.mxu0 %v280
    %561 = vmatprep.subr.mxu0 %v279
    %562 = vmatpush1.msra.mxu0 %v278
    %563 = vmatprep.subr.mxu0 %v277
    %564 = vmatpush1.msra.mxu0 %v276
    %565 = vmatprep.subr.mxu0 %v275
    %566 = vmatpush1.msra.mxu0 %v274
    %567 = vmatprep.subr.mxu0 %v273
    %568 = vmatpush1.msra.mxu0 %v272
    %569 = vmatprep.subr.mxu0 %v271
    %570 = vmatpush1.msra.mxu0 %v270
    %571 = vmatprep.subr.mxu0 %v269
    %572 = vmatpush1.msra.mxu0 %v268
    %573 = vmatprep.subr.mxu0 %v267
    %574 = vmatpush1.msra.mxu0 %v266
    %575 = vmatprep.subr.mxu0 %v265
    %576 = vmatpush1.msra.mxu0 %v264
    %577 = vmatprep.subr.mxu0 %v263
    %578 = vmatpush1.msra.mxu0 %v262
    %579 = vmatprep.subr.mxu0 %v261
    %580 = vmatpush1.msra.mxu0 %v260
    %581 = vmatprep.subr.mxu0 %v259
    %582 = vmatpush1.msra.mxu0 %v258
    %583 = vmatprep.subr.mxu0 %v257
    %584 = vmatpush1.msra.mxu0 %v256
    %585 = vmatprep.subr.mxu0 %v255
    %586 = vmatpush1.msra.mxu0 %v254
    %587 = vmatprep.subr.mxu0 %v317
    %588 = vmatpush2.msra.mxu0 %v316
    %589 = vmatprep.subr.mxu0 %v315
    %590 = vmatpush2.msra.mxu0 %v314
    %591 = vmatprep.subr.mxu0 %v313
    %592 = vmatpush2.msra.mxu0 %v312
    %593 = vmatprep.subr.mxu0 %v311
    %594 = vmatpush2.msra.mxu0 %v310
    %595 = vmatprep.subr.mxu0 %v309
    %596 = vmatpush2.msra.mxu0 %v308
    %597 = vmatprep.subr.mxu0 %v307
    %598 = vmatpush2.msra.mxu0 %v306
    %599 = vmatprep.subr.mxu0 %v305
    %600 = vmatpush2.msra.mxu0 %v304
    %601 = vmatprep.subr.mxu0 %v303
    %602 = vmatpush2.msra.mxu0 %v302
    %603 = vmatprep.subr.mxu0 %v301
    %604 = vmatpush2.msra.mxu0 %v300
    %605 = vmatprep.subr.mxu0 %v299
    %606 = vmatpush2.msra.mxu0 %v298
    %607 = vmatprep.subr.mxu0 %v297
    %608 = vmatpush2.msra.mxu0 %v296
    %609 = vmatprep.subr.mxu0 %v295
    %610 = vmatpush2.msra.mxu0 %v294
    %611 = vmatprep.subr.mxu0 %v293
    %612 = vmatpush2.msra.mxu0 %v292
    %613 = vmatprep.subr.mxu0 %v291
    %614 = vmatpush2.msra.mxu0 %v290
    %615 = vmatprep.subr.mxu0 %v289
    %616 = vmatpush2.msra.mxu0 %v288
    %617 = vmatprep.subr.mxu0 %v287
    %618 = vmatpush2.msra.mxu0 %v286
    %619 = vmatprep.mubr.f32.mxu0 %v554
    %620 = vmatmul.mubr.f32.gmra.mxu0 %v553
    %v621 = vpop.f32.mrf.mxu0
    %v622 = vadd.f32 %v323, %v621
    %v623 = vpop.f32.mrf.mxu0
    %v624 = vadd.f32 %v327, %v623
    %625 = vdwg.mxu0
    %v626 = vmul.f32 %v622, 0.01
    %v627 = vmul.f32 %v624, 0.01
    %v628 = vmax.f32 %v622, %v626
    %v629 = vmax.f32 %v624, %v627
    %630 = vmatprep.subr.mxu0 %v285
    %631 = vmatpush1.msra.mxu0 %v284
    %632 = vmatprep.subr.mxu0 %v283
    %633 = vmatpush1.msra.mxu0 %v282
    %634 = vmatprep.subr.mxu0 %v281
    %635 = vmatpush1.msra.mxu0 %v280
    %636 = vmatprep.subr.mxu0 %v279
    %637 = vmatpush1.msra.mxu0 %v278
    %638 = vmatprep.subr.mxu0 %v277
    %639 = vmatpush1.msra.mxu0 %v276
    %640 = vmatprep.subr.mxu0 %v275
    %641 = vmatpush1.msra.mxu0 %v274
    %642 = vmatprep.subr.mxu0 %v273
    %643 = vmatpush1.msra.mxu0 %v272
    %644 = vmatprep.subr.mxu0 %v271
    %645 = vmatpush1.msra.mxu0 %v270
    %646 = vmatprep.subr.mxu0 %v269
    %647 = vmatpush1.msra.mxu0 %v268
    %648 = vmatprep.subr.mxu0 %v267
    %649 = vmatpush1.msra.mxu0 %v266
    %650 = vmatprep.subr.mxu0 %v265
    %651 = vmatpush1.msra.mxu0 %v264
    %652 = vmatprep.subr.mxu0 %v263
    %653 = vmatpush1.msra.mxu0 %v262
    %654 = vmatprep.subr.mxu0 %v261
    %655 = vmatpush1.msra.mxu0 %v260
    %656 = vmatprep.subr.mxu0 %v259
    %657 = vmatpush1.msra.mxu0 %v258
    %658 = vmatprep.subr.mxu0 %v257
    %659 = vmatpush1.msra.mxu0 %v256
    %660 = vmatprep.subr.mxu0 %v255
    %661 = vmatpush1.msra.mxu0 %v254
    %662 = vmatprep.subr.mxu0 %v317
    %663 = vmatpush2.msra.mxu0 %v316
    %664 = vmatprep.subr.mxu0 %v315
    %665 = vmatpush2.msra.mxu0 %v314
    %666 = vmatprep.subr.mxu0 %v313
    %667 = vmatpush2.msra.mxu0 %v312
    %668 = vmatprep.subr.mxu0 %v311
    %669 = vmatpush2.msra.mxu0 %v310
    %670 = vmatprep.subr.mxu0 %v309
    %671 = vmatpush2.msra.mxu0 %v308
    %672 = vmatprep.subr.mxu0 %v307
    %673 = vmatpush2.msra.mxu0 %v306
    %674 = vmatprep.subr.mxu0 %v305
    %675 = vmatpush2.msra.mxu0 %v304
    %676 = vmatprep.subr.mxu0 %v303
    %677 = vmatpush2.msra.mxu0 %v302
    %678 = vmatprep.subr.mxu0 %v301
    %679 = vmatpush2.msra.mxu0 %v300
    %680 = vmatprep.subr.mxu0 %v299
    %681 = vmatpush2.msra.mxu0 %v298
    %682 = vmatprep.subr.mxu0 %v297
    %683 = vmatpush2.msra.mxu0 %v296
    %684 = vmatprep.subr.mxu0 %v295
    %685 = vmatpush2.msra.mxu0 %v294
    %686 = vmatprep.subr.mxu0 %v293
    %687 = vmatpush2.msra.mxu0 %v292
    %688 = vmatprep.subr.mxu0 %v291
    %689 = vmatpush2.msra.mxu0 %v290
    %690 = vmatprep.subr.mxu0 %v289
    %691 = vmatpush2.msra.mxu0 %v288
    %692 = vmatprep.subr.mxu0 %v287
    %693 = vmatpush2.msra.mxu0 %v286
    %694 = vmatprep.mubr.f32.mxu0 %v629
    %695 = vmatmul.mubr.f32.gmra.mxu0 %v628
    %v696 = vpop.f32.mrf.mxu0
    %v697 = vadd.f32 %v323, %v696
    %v698 = vpop.f32.mrf.mxu0
    %v699 = vadd.f32 %v327, %v698
    %700 = vdwg.mxu0
    %v701 = vmul.f32 %v697, 0.01
    %v702 = vmul.f32 %v699, 0.01
    %v703 = vmax.f32 %v697, %v701
    %v704 = vmax.f32 %v699, %v702
    %705 = vmatprep.subr.mxu0 %v285
    %706 = vmatpush1.msra.mxu0 %v284
    %707 = vmatprep.subr.mxu0 %v283
    %708 = vmatpush1.msra.mxu0 %v282
    %709 = vmatprep.subr.mxu0 %v281
    %710 = vmatpush1.msra.mxu0 %v280
    %711 = vmatprep.subr.mxu0 %v279
    %712 = vmatpush1.msra.mxu0 %v278
    %713 = vmatprep.subr.mxu0 %v277
    %714 = vmatpush1.msra.mxu0 %v276
    %715 = vmatprep.subr.mxu0 %v275
    %716 = vmatpush1.msra.mxu0 %v274
    %717 = vmatprep.subr.mxu0 %v273
    %718 = vmatpush1.msra.mxu0 %v272
    %719 = vmatprep.subr.mxu0 %v271
    %720 = vmatpush1.msra.mxu0 %v270
    %721 = vmatprep.subr.mxu0 %v269
    %722 = vmatpush1.msra.mxu0 %v268
    %723 = vmatprep.subr.mxu0 %v267
    %724 = vmatpush1.msra.mxu0 %v266
    %725 = vmatprep.subr.mxu0 %v265
    %726 = vmatpush1.msra.mxu0 %v264
    %727 = vmatprep.subr.mxu0 %v263
    %728 = vmatpush1.msra.mxu0 %v262
    %729 = vmatprep.subr.mxu0 %v261
    %730 = vmatpush1.msra.mxu0 %v260
    %731 = vmatprep.subr.mxu0 %v259
    %732 = vmatpush1.msra.mxu0 %v258
    %733 = vmatprep.subr.mxu0 %v257
    %734 = vmatpush1.msra.mxu0 %v256
    %735 = vmatprep.subr.mxu0 %v255
    %736 = vmatpush1.msra.mxu0 %v254
    %737 = vmatprep.subr.mxu0 %v317
    %738 = vmatpush2.msra.mxu0 %v316
    %739 = vmatprep.subr.mxu0 %v315
    %740 = vmatpush2.msra.mxu0 %v314
    %741 = vmatprep.subr.mxu0 %v313
    %742 = vmatpush2.msra.mxu0 %v312
    %743 = vmatprep.subr.mxu0 %v311
    %744 = vmatpush2.msra.mxu0 %v310
    %745 = vmatprep.subr.mxu0 %v309
    %746 = vmatpush2.msra.mxu0 %v308
    %747 = vmatprep.subr.mxu0 %v307
    %748 = vmatpush2.msra.mxu0 %v306
    %749 = vmatprep.subr.mxu0 %v305
    %750 = vmatpush2.msra.mxu0 %v304
    %751 = vmatprep.subr.mxu0 %v303
    %752 = vmatpush2.msra.mxu0 %v302
    %753 = vmatprep.subr.mxu0 %v301
    %754 = vmatpush2.msra.mxu0 %v300
    %755 = vmatprep.subr.mxu0 %v299
    %756 = vmatpush2.msra.mxu0 %v298
    %757 = vmatprep.subr.mxu0 %v297
    %758 = vmatpush2.msra.mxu0 %v296
    %759 = vmatprep.subr.mxu0 %v295
    %760 = vmatpush2.msra.mxu0 %v294
    %761 = vmatprep.subr.mxu0 %v293
    %762 = vmatpush2.msra.mxu0 %v292
    %763 = vmatprep.subr.mxu0 %v291
    %764 = vmatpush2.msra.mxu0 %v290
    %765 = vmatprep.subr.mxu0 %v289
    %766 = vmatpush2.msra.mxu0 %v288
    %767 = vmatprep.subr.mxu0 %v287
    %768 = vmatpush2.msra.mxu0 %v286
    %769 = vmatprep.mubr.f32.mxu0 %v704
    %770 = vmatmul.mubr.f32.gmra.mxu0 %v703
    %v771 = vpop.f32.mrf.mxu0
    %v772 = vadd.f32 %v323, %v771
    %v773 = vpop.f32.mrf.mxu0
    %v774 = vadd.f32 %v327, %v773
    %775 = vdwg.mxu0
    %v776 = vmul.f32 %v772, 0.01
    %v777 = vmul.f32 %v774, 0.01
    %v778 = vmax.f32 %v772, %v776
    %v779 = vmax.f32 %v774, %v777
    %v780 = vld [vmem:[%s5] sm:$0xff]
    %v781 = vld [vmem:[%s5 + $0x8] sm:$0xff]
    %v782 = vld [vmem:[%s5 + $0x10] sm:$0xff]
    %v783 = vld [vmem:[%s5 + $0x18] sm:$0xff]
    %v784 = vld [vmem:[%s5 + $0x20] sm:$0xff]
    %v785 = vld [vmem:[%s5 + $0x28] sm:$0xff]
    %v786 = vld [vmem:[%s5 + $0x30] sm:$0xff]
    %v787 = vld [vmem:[%s5 + $0x38] sm:$0xff]
    %v788 = vld [vmem:[%s5 + $0x40] sm:$0xff]
    %v789 = vld [vmem:[%s5 + $0x48] sm:$0xff]
    %v790 = vld [vmem:[%s5 + $0x50] sm:$0xff]
    %v791 = vld [vmem:[%s5 + $0x58] sm:$0xff]
    %v792 = vld [vmem:[%s5 + $0x60] sm:$0xff]
    %v793 = vld [vmem:[%s5 + $0x68] sm:$0xff]
    %v794 = vld [vmem:[%s5 + $0x70] sm:$0xff]
    %v795 = vld [vmem:[%s5 + $0x78] sm:$0xff]
    %v796 = vld [vmem:[%s5 + $0x80] sm:$0xff]
    %v797 = vld [vmem:[%s5 + $0x88] sm:$0xff]
    %v798 = vld [vmem:[%s5 + $0x90] sm:$0xff]
    %v799 = vld [vmem:[%s5 + $0x98] sm:$0xff]
    %v800 = vld [vmem:[%s5 + $0xa0] sm:$0xff]
    %v801 = vld [vmem:[%s5 + $0xa8] sm:$0xff]
    %v802 = vld [vmem:[%s5 + $0xb0] sm:$0xff]
    %v803 = vld [vmem:[%s5 + $0xb8] sm:$0xff]
    %v804 = vld [vmem:[%s5 + $0xc0] sm:$0xff]
    %v805 = vld [vmem:[%s5 + $0xc8] sm:$0xff]
    %v806 = vld [vmem:[%s5 + $0xd0] sm:$0xff]
    %v807 = vld [vmem:[%s5 + $0xd8] sm:$0xff]
    %v808 = vld [vmem:[%s5 + $0xe0] sm:$0xff]
    %v809 = vld [vmem:[%s5 + $0xe8] sm:$0xff]
    %v810 = vld [vmem:[%s5 + $0xf0] sm:$0xff]
    %v811 = vld [vmem:[%s5 + $0xf8] sm:$0xff]
    %v812 = vld [vmem:[%s6] sm:$0x1]
    %v814 = vlaneseq
    %v815 = vshrl.u32 %v814, 7
    %v816 = vsub.s32 0, %v815
    %v817 = vrot.slane %v812, %v816
    %819 = vmatprep.subr.mxu0 0.0
    %820 = vmatpush1.msra.mxu0 %v795
    %821 = vmatprep.subr.mxu0 0.0
    %822 = vmatpush1.msra.mxu0 %v794
    %823 = vmatprep.subr.mxu0 0.0
    %824 = vmatpush1.msra.mxu0 %v793
    %825 = vmatprep.subr.mxu0 0.0
    %826 = vmatpush1.msra.mxu0 %v792
    %827 = vmatprep.subr.mxu0 0.0
    %828 = vmatpush1.msra.mxu0 %v791
    %829 = vmatprep.subr.mxu0 0.0
    %830 = vmatpush1.msra.mxu0 %v790
    %831 = vmatprep.subr.mxu0 0.0
    %832 = vmatpush1.msra.mxu0 %v789
    %833 = vmatprep.subr.mxu0 0.0
    %834 = vmatpush1.msra.mxu0 %v788
    %835 = vmatprep.subr.mxu0 0.0
    %836 = vmatpush1.msra.mxu0 %v787
    %837 = vmatprep.subr.mxu0 0.0
    %838 = vmatpush1.msra.mxu0 %v786
    %839 = vmatprep.subr.mxu0 0.0
    %840 = vmatpush1.msra.mxu0 %v785
    %841 = vmatprep.subr.mxu0 0.0
    %842 = vmatpush1.msra.mxu0 %v784
    %843 = vmatprep.subr.mxu0 0.0
    %844 = vmatpush1.msra.mxu0 %v783
    %845 = vmatprep.subr.mxu0 0.0
    %846 = vmatpush1.msra.mxu0 %v782
    %847 = vmatprep.subr.mxu0 0.0
    %848 = vmatpush1.msra.mxu0 %v781
    %849 = vmatprep.subr.mxu0 0.0
    %850 = vmatpush1.msra.mxu0 %v780
    %851 = vmatprep.subr.mxu0 0.0
    %852 = vmatpush2.msra.mxu0 %v811
    %853 = vmatprep.subr.mxu0 0.0
    %854 = vmatpush2.msra.mxu0 %v810
    %855 = vmatprep.subr.mxu0 0.0
    %856 = vmatpush2.msra.mxu0 %v809
    %857 = vmatprep.subr.mxu0 0.0
    %858 = vmatpush2.msra.mxu0 %v808
    %859 = vmatprep.subr.mxu0 0.0
    %860 = vmatpush2.msra.mxu0 %v807
    %861 = vmatprep.subr.mxu0 0.0
    %862 = vmatpush2.msra.mxu0 %v806
    %863 = vmatprep.subr.mxu0 0.0
    %864 = vmatpush2.msra.mxu0 %v805
    %865 = vmatprep.subr.mxu0 0.0
    %866 = vmatpush2.msra.mxu0 %v804
    %867 = vmatprep.subr.mxu0 0.0
    %868 = vmatpush2.msra.mxu0 %v803
    %869 = vmatprep.subr.mxu0 0.0
    %870 = vmatpush2.msra.mxu0 %v802
    %871 = vmatprep.subr.mxu0 0.0
    %872 = vmatpush2.msra.mxu0 %v801
    %873 = vmatprep.subr.mxu0 0.0
    %874 = vmatpush2.msra.mxu0 %v800
    %875 = vmatprep.subr.mxu0 0.0
    %876 = vmatpush2.msra.mxu0 %v799
    %877 = vmatprep.subr.mxu0 0.0
    %878 = vmatpush2.msra.mxu0 %v798
    %879 = vmatprep.subr.mxu0 0.0
    %880 = vmatpush2.msra.mxu0 %v797
    %881 = vmatprep.subr.mxu0 0.0
    %882 = vmatpush2.msra.mxu0 %v796
    %883 = vmatprep.mubr.f32.mxu0 %v779
    %884 = vmatmul.mubr.f32.gmra.mxu0 %v778
    %v885 = vpop.f32.mrf.mxu0
    %v886 = vadd.f32 %v817, %v885
    %v887 = vpop.f32.mrf.mxu0
    %888 = vdwg.mxu0
    %v889 = vtanh.pop %v886
    %vm890 = vcmask 31744
    %891 = vst.msk [vmem:[%s7] sm:$0xff] %vm890, %v889
    // Predicated region
    $region34: #{tpu_custom_call.1} parent=1 // pred_check
      _
    $region35: #{tpu_custom_call.1} parent=1 // pred_check_branch
      %893 = sbr.rel (0) target = $region37
    $region36: #{tpu_custom_call.1} parent=1 // pred_region
      _
    $region37: #{tpu_custom_call.1} parent=1 // pred_fallthru
      _
    // Predicated region
    $region38: #{tpu_custom_call.1} parent=1 // pred_check
      _
    $region39: #{tpu_custom_call.1} parent=1 // pred_check_branch
      %895 = sbr.rel (0) target = $region41
    $region40: #{tpu_custom_call.1} parent=1 // pred_region
      _
    $region41: #{tpu_custom_call.1} parent=1 // pred_fallthru
      _
    %896 = vsyncpa [#allocation3], 1

</llo_original>
